<compile_context>
chip_gen: v7x
topology: tpu7x:2x2x1
jax: 0.10.0
libtpu: 0.0.40
codegen_flags: <defaults>
</compile_context>

<pallas_src>
import functools

import jax
import jax.numpy as jnp
from jax import lax
from jax.experimental import pallas as pl
from jax.experimental.pallas import tpu as pltpu


def _round_up(n, m):
    return ((n + m - 1) // m) * m


def _center_loss_kernel(labels_sref, x_ref, c_hbm, out_ref,
                        cbuf, sem, acc_ref,
                        *, batch_size, tile, tiles_per_core):
    """One grid step handles one (tile, D) batch tile.

    labels_sref : (B_pad,)     int32, SMEM scalar-prefetch
    x_ref       : (tile, D)    native dtype, VMEM (auto-pipelined block)
    c_hbm       : (C, D)       native dtype, raw HBM ref (memory_space=pl.ANY)
    out_ref     : (1, 8, 128)  f32 VMEM block -- per-shard partial mean
    cbuf        : (2, tile, D) VMEM gather buffer (double-buffered)
    sem         : (2, tile)    DMA semaphores (one per gathered row)
    acc_ref     : (tile, 1)    f32 VMEM per-row accumulator
    """
    c = pl.program_id(0)            # batch shard (maps to a TensorCore on v7x)
    t = pl.program_id(1)            # tile index within this shard
    g = c * tiles_per_core + t      # global tile index

    def issue_gather(tile_idx, slot):
        base = tile_idx * tile

        def body(j, carry):
            lbl = labels_sref[base + j]
            pltpu.make_async_copy(c_hbm.at[lbl], cbuf.at[slot, j],
                                  sem.at[slot, j]).start()
            return carry

        lax.fori_loop(0, tile, body, 0)

    slot = t & 1

    @pl.when(t == 0)
    def _():
        acc_ref[...] = jnp.zeros_like(acc_ref)
        issue_gather(g, 0)                      # this shard's first tile

    # Prefetch the next tile's centers into the other buffer half while the
    # current tile's DMAs complete / compute runs.
    @pl.when(t + 1 < tiles_per_core)
    def _():
        issue_gather(g + 1, 1 - slot)

    # Wait for the current tile's gathered center rows.
    def wait_body(j, carry):
        pltpu.make_async_copy(c_hbm.at[0], cbuf.at[slot, j],
                              sem.at[slot, j]).wait()
        return carry

    lax.fori_loop(0, tile, wait_body, 0)

    # ||x_i - centers[labels_i]||^2 per row; upcast to f32 *inside* the kernel.
    xf = x_ref[...].astype(jnp.float32)
    cf = cbuf[slot].astype(jnp.float32)
    d = xf - cf                                            # VPU
    per_row = jnp.sum(d * d, axis=1, keepdims=True)        # (tile, 1) lane reduce
    per_row = jnp.clip(per_row, 1e-12, 1e12)               # matches torch clamp
    # Mask rows that only exist because of batch padding.
    row = lax.broadcasted_iota(jnp.int32, (tile, 1), 0) + g * tile
    per_row = jnp.where(row < batch_size, per_row, 0.0)
    acc_ref[...] += per_row

    @pl.when(t == tiles_per_core - 1)
    def _():
        partial = jnp.sum(acc_ref[...]) / jnp.float32(batch_size)
        out_ref[...] = jnp.full(out_ref.shape, partial, dtype=jnp.float32)


def center_loss_pallas(x, centers, labels, *, tile=None, num_cores=2):
    """Pallas CenterLoss forward.

    x:       (B, D) features (any float dtype; upcast to f32 in-kernel)
    centers: (C, D) class centers (any float dtype; gathered in native dtype)
    labels:  (B,)   int class ids
    returns scalar f32 loss = mean_i clamp(||x_i - centers[labels_i]||^2, 1e-12, 1e12)
    """
    B, D = x.shape
    C, D2 = centers.shape
    assert D == D2, "feature dims of x and centers must match"

    # Guard the gather: out-of-range labels would otherwise be an OOB DMA.
    labels_i32 = jnp.clip(labels.astype(jnp.int32), 0, C - 1)

    x_bytes = jnp.dtype(x.dtype).itemsize
    c_bytes = jnp.dtype(centers.dtype).itemsize

    # Batch tile: multiple of 8, capped so double-buffered x + gather scratch
    # stay well under the scoped-VMEM default on every generation
    # (v5e 16 MiB, v6e/v7x 32 MiB scoped).
    if tile is None:
        budget = 12 * 1024 * 1024
        per_row = 2 * D * x_bytes + 2 * D * c_bytes + 16
        tb = max(8, min(256, budget // per_row))
        tb = (tb // 8) * 8
        tile = min(tb, _round_up(B, 8))
    tile = max(8, _round_up(int(tile), 8))

    total_tiles = pl.cdiv(B, tile)
    nc = num_cores if total_tiles >= num_cores else 1   # v7x: 2 TCs; else 1
    tiles_per_core = pl.cdiv(total_tiles, nc)
    total_tiles = nc * tiles_per_core
    b_pad = total_tiles * tile

    if b_pad != B:
        x = jnp.pad(x, ((0, b_pad - B), (0, 0)))
        labels_i32 = jnp.pad(labels_i32, (0, b_pad - B))

    kernel = functools.partial(_center_loss_kernel, batch_size=B,
                               tile=tile, tiles_per_core=tiles_per_core)

    out = pl.pallas_call(
        kernel,
        out_shape=jax.ShapeDtypeStruct((nc, 8, 128), jnp.float32),
        grid_spec=pltpu.PrefetchScalarGridSpec(
            num_scalar_prefetch=1,                # labels -> SMEM
            grid=(nc, tiles_per_core),
            in_specs=[
                # x batch tile (auto-pipelined, native dtype)
                pl.BlockSpec((tile, D),
                             lambda c, t, labels: (c * tiles_per_core + t, 0)),
                # centers stay in HBM; rows are gathered by manual DMA
                pl.BlockSpec(memory_space=pl.ANY),
            ],
            # Lane-dense per-shard partials; each shard writes its own block.
            out_specs=pl.BlockSpec((1, 8, 128), lambda c, t, labels: (c, 0, 0)),
            scratch_shapes=[
                pltpu.VMEM((2, tile, D), centers.dtype),   # gather double-buffer
                pltpu.SemaphoreType.DMA((2, tile)),        # per-row DMA sems
                pltpu.VMEM((tile, 1), jnp.float32),        # per-row accumulator
            ],
        ),
        compiler_params=pltpu.CompilerParams(
            # leading axis shards the batch across TensorCores on v7x;
            # tile axis carries the accumulator -> arbitrary.
            dimension_semantics=("parallel", "arbitrary"),
            # Explicit scoped-VMEM budget (raises v5e's 16 MiB default; equals
            # the v6e/v7x default, so safe everywhere).
            vmem_limit_bytes=32 * 1024 * 1024,
        ),
    )(labels_i32, x, centers)

    # Per-shard partials are already divided by B; sum them for the mean.
    return jnp.sum(out[:, 0, 0])


def center_loss_ref(x, centers, labels):
    """Pure-JAX reference mirroring the PyTorch forward (expanded distmat form)."""
    x = x.astype(jnp.float32)
    centers = centers.astype(jnp.float32)
    B = x.shape[0]
    C = centers.shape[0]
    distmat = (jnp.sum(x * x, axis=1, keepdims=True)
               + jnp.sum(centers * centers, axis=1)[None, :]
               - 2.0 * jnp.dot(x, centers.T, precision=jax.lax.Precision.HIGHEST))
    mask = labels[:, None] == jnp.arange(C)[None, :]
    dist = jnp.where(mask, jnp.clip(distmat, 1e-12, 1e12), 0.0)
    return jnp.sum(dist) / B


if __name__ == "__main__":
    k1, k2, k3, k4, k5, k6 = jax.random.split(jax.random.PRNGKey(0), 6)

    # Case 1: tiny batch (B <= tile) -> single grid step, all gather DMAs in
    # flight at once. C=751 matches the module default num_classes.
    B, C, D = 8, 751, 256
    x = jax.random.normal(k1, (B, D), dtype=jnp.float32)
    centers = jax.random.normal(k2, (C, D), dtype=jnp.float32)
    labels = jax.random.randint(k3, (B,), 0, C, dtype=jnp.int32)

    loss = jax.block_until_ready(center_loss_pallas(x, centers, labels))
    loss_ref = center_loss_ref(x, centers, labels)
    assert jnp.allclose(loss, loss_ref, rtol=1e-4, atol=1e-4), (loss, loss_ref)

    # Case 2: multi-tile path -- exercises batch padding/masking, the
    # double-buffered gather prefetch, the 2-way shard split, and the
    # in-kernel upcast of non-f32 (bf16) centers.
    B2, C2, D2 = 300, 751, 256
    x2 = jax.random.normal(k4, (B2, D2), dtype=jnp.float32)
    centers2 = jax.random.normal(k5, (C2, D2), dtype=jnp.float32).astype(jnp.bfloat16)
    labels2 = jax.random.randint(k6, (B2,), 0, C2, dtype=jnp.int32)

    loss2 = jax.block_until_ready(center_loss_pallas(x2, centers2, labels2, tile=64))
    loss2_ref = center_loss_ref(x2, centers2, labels2)
    assert jnp.allclose(loss2, loss2_ref, rtol=1e-3, atol=1e-3), (loss2, loss2_ref)

    print("KERNEL_OK")
</pallas_src>

<mosaic_0001>
module attributes {stable_mosaic.version = 11 : i64} {
  func.func @_center_loss_kernel(%arg0: i32, %arg1: i32, %arg2: memref<8xi32, #tpu.memory_space<smem>>, %arg3: memref<8x256xf32, #tpu.memory_space<vmem>>, %arg4: memref<751x256xf32, #tpu.memory_space<any>>, %arg5: memref<1x8x128xf32, #tpu.memory_space<vmem>>, %arg6: memref<2x8x256xf32, #tpu.memory_space<vmem>>, %arg7: memref<2x8x!tpu.dma_semaphore, #tpu.memory_space<semaphore_mem>>, %arg8: memref<8x1xf32, #tpu.memory_space<vmem>>) attributes {dimension_semantics = [#tpu.dimension_semantics<parallel>, #tpu.dimension_semantics<arbitrary>], iteration_bounds = array<i64: 1, 1>, scalar_prefetch = 1 : i64, scratch_operands = 3 : i64, tpu.core_type = #tpu.core_type<tc>, window_params = [{transform_indices = @transform_0, window_bounds = array<i64: 8, 256>}, {}, {transform_indices = @transform_2, window_bounds = array<i64: 1, 8, 128>}]} {
    %c1_i32 = arith.constant 1 : i32
    %0 = arith.muli %arg0, %c1_i32 : i32
    %1 = arith.addi %0, %arg1 : i32
    %c1_i32_0 = arith.constant 1 : i32
    %2 = arith.andi %arg1, %c1_i32_0 : i32
    %c0_i32 = arith.constant 0 : i32
    %3 = arith.cmpi eq, %arg1, %c0_i32 : i32
    %4 = arith.extui %3 : i1 to i32
    %c0_i32_1 = arith.constant 0 : i32
    %5 = arith.cmpi ne, %4, %c0_i32_1 : i32
    scf.if %5 {
      %cst_22 = arith.constant 0.000000e+00 : f32
      %37 = vector.broadcast %cst_22 : f32 to vector<8x1xf32>
      %c0_23 = arith.constant 0 : index
      %c0_24 = arith.constant 0 : index
      %38 = vector.load %arg8[%c0_23, %c0_24] : memref<8x1xf32, #tpu.memory_space<vmem>>, vector<8x1xf32>
      tpu.vector_store %arg8[%c0_23, %c0_24], %37 {strides = array<i32>} : memref<8x1xf32, #tpu.memory_space<vmem>>, vector<8x1xf32>,
      %c8_i32_25 = arith.constant 8 : i32
      %39 = arith.muli %1, %c8_i32_25 : i32
      %c0_i32_26 = arith.constant 0 : i32
      %c8_i32_27 = arith.constant 8 : i32
      %40 = arith.addi %c0_i32_26, %c8_i32_27 : i32
      %c1_i32_28 = arith.constant 1 : i32
      scf.for %arg9 = %c0_i32_26 to %40 step %c1_i32_28  : i32 {
        %41 = arith.addi %39, %arg9 : i32
        %42 = arith.index_cast %41 : i32 to index
        %43 = memref.load %arg2[%42] : memref<8xi32, #tpu.memory_space<smem>>
        %c0_i32_30 = arith.constant 0 : i32
        %c0_i32_31 = arith.constant 0 : i32
        %c0_i32_32 = arith.constant 0 : i32
        %44 = tpu.memref_slice %arg4[%43, %c0_i32_32] : memref<751x256xf32, #tpu.memory_space<any>> -> memref<1x256xf32, #tpu.memory_space<any>>
        %45 = tpu.memref_squeeze %44 : memref<1x256xf32, #tpu.memory_space<any>> -> memref<256xf32, #tpu.memory_space<any>>
        %c0_i32_33 = arith.constant 0 : i32
        %46 = tpu.memref_slice %arg6[%c0_i32_30, %arg9, %c0_i32_33] : memref<2x8x256xf32, #tpu.memory_space<vmem>> -> memref<1x1x256xf32, #tpu.memory_space<vmem>>
        %47 = tpu.memref_squeeze %46 : memref<1x1x256xf32, #tpu.memory_space<vmem>> -> memref<256xf32, #tpu.memory_space<vmem>>
        %48 = tpu.memref_slice %arg7[%c0_i32_31, %arg9] : memref<2x8x!tpu.dma_semaphore, #tpu.memory_space<semaphore_mem>> -> memref<1x1x!tpu.dma_semaphore, #tpu.memory_space<semaphore_mem>>
        %49 = tpu.memref_squeeze %48 : memref<1x1x!tpu.dma_semaphore, #tpu.memory_space<semaphore_mem>> -> memref<!tpu.dma_semaphore, #tpu.memory_space<semaphore_mem>>
        tpu.enqueue_dma source(%45 : memref<256xf32, #tpu.memory_space<any>>) target(%47 : memref<256xf32, #tpu.memory_space<vmem>>) target_semaphore(%49 : memref<!tpu.dma_semaphore, #tpu.memory_space<semaphore_mem>>)
      }
      %c8_i32_29 = arith.constant 8 : i32
    } else {
    }
    %c1_i32_2 = arith.constant 1 : i32
    %6 = arith.addi %arg1, %c1_i32_2 : i32
    %c1_i32_3 = arith.constant 1 : i32
    %7 = arith.cmpi slt, %6, %c1_i32_3 : i32
    %8 = arith.extui %7 : i1 to i32
    %c0_i32_4 = arith.constant 0 : i32
    %9 = arith.cmpi ne, %8, %c0_i32_4 : i32
    scf.if %9 {
      %c1_i32_22 = arith.constant 1 : i32
      %37 = arith.addi %1, %c1_i32_22 : i32
      %c1_i32_23 = arith.constant 1 : i32
      %38 = arith.subi %c1_i32_23, %2 : i32
      %c8_i32_24 = arith.constant 8 : i32
      %39 = arith.muli %37, %c8_i32_24 : i32
      %c0_i32_25 = arith.constant 0 : i32
      %c8_i32_26 = arith.constant 8 : i32
      %40 = arith.addi %c0_i32_25, %c8_i32_26 : i32
      %c1_i32_27 = arith.constant 1 : i32
      scf.for %arg9 = %c0_i32_25 to %40 step %c1_i32_27  : i32 {
        %41 = arith.addi %39, %arg9 : i32
        %42 = arith.index_cast %41 : i32 to index
        %43 = memref.load %arg2[%42] : memref<8xi32, #tpu.memory_space<smem>>
        %c0_i32_29 = arith.constant 0 : i32
        %44 = tpu.memref_slice %arg4[%43, %c0_i32_29] : memref<751x256xf32, #tpu.memory_space<any>> -> memref<1x256xf32, #tpu.memory_space<any>>
        %45 = tpu.memref_squeeze %44 : memref<1x256xf32, #tpu.memory_space<any>> -> memref<256xf32, #tpu.memory_space<any>>
        %c0_i32_30 = arith.constant 0 : i32
        %46 = tpu.memref_slice %arg6[%38, %arg9, %c0_i32_30] : memref<2x8x256xf32, #tpu.memory_space<vmem>> -> memref<1x1x256xf32, #tpu.memory_space<vmem>>
        %47 = tpu.memref_squeeze %46 : memref<1x1x256xf32, #tpu.memory_space<vmem>> -> memref<256xf32, #tpu.memory_space<vmem>>
        %48 = tpu.memref_slice %arg7[%38, %arg9] : memref<2x8x!tpu.dma_semaphore, #tpu.memory_space<semaphore_mem>> -> memref<1x1x!tpu.dma_semaphore, #tpu.memory_space<semaphore_mem>>
        %49 = tpu.memref_squeeze %48 : memref<1x1x!tpu.dma_semaphore, #tpu.memory_space<semaphore_mem>> -> memref<!tpu.dma_semaphore, #tpu.memory_space<semaphore_mem>>
        tpu.enqueue_dma source(%45 : memref<256xf32, #tpu.memory_space<any>>) target(%47 : memref<256xf32, #tpu.memory_space<vmem>>) target_semaphore(%49 : memref<!tpu.dma_semaphore, #tpu.memory_space<semaphore_mem>>)
      }
      %c8_i32_28 = arith.constant 8 : i32
    } else {
    }
    %c0_i32_5 = arith.constant 0 : i32
    %c8_i32 = arith.constant 8 : i32
    %10 = arith.addi %c0_i32_5, %c8_i32 : i32
    %c1_i32_6 = arith.constant 1 : i32
    scf.for %arg9 = %c0_i32_5 to %10 step %c1_i32_6  : i32 {
      %c0_i32_22 = arith.constant 0 : i32
      %c0_i32_23 = arith.constant 0 : i32
      %37 = tpu.memref_slice %arg4[%c0_i32_22, %c0_i32_23] : memref<751x256xf32, #tpu.memory_space<any>> -> memref<1x256xf32, #tpu.memory_space<any>>
      %38 = tpu.memref_squeeze %37 : memref<1x256xf32, #tpu.memory_space<any>> -> memref<256xf32, #tpu.memory_space<any>>
      %c0_i32_24 = arith.constant 0 : i32
      %39 = tpu.memref_slice %arg6[%2, %arg9, %c0_i32_24] : memref<2x8x256xf32, #tpu.memory_space<vmem>> -> memref<1x1x256xf32, #tpu.memory_space<vmem>>
      %40 = tpu.memref_squeeze %39 : memref<1x1x256xf32, #tpu.memory_space<vmem>> -> memref<256xf32, #tpu.memory_space<vmem>>
      %41 = tpu.memref_slice %arg7[%2, %arg9] : memref<2x8x!tpu.dma_semaphore, #tpu.memory_space<semaphore_mem>> -> memref<1x1x!tpu.dma_semaphore, #tpu.memory_space<semaphore_mem>>
      %42 = tpu.memref_squeeze %41 : memref<1x1x!tpu.dma_semaphore, #tpu.memory_space<semaphore_mem>> -> memref<!tpu.dma_semaphore, #tpu.memory_space<semaphore_mem>>
      tpu.wait_dma2 semaphore(%42 : memref<!tpu.dma_semaphore, #tpu.memory_space<semaphore_mem>>) src(%38 : memref<256xf32, #tpu.memory_space<any>>) dst(%40 : memref<256xf32, #tpu.memory_space<vmem>>)
    }
    %c8_i32_7 = arith.constant 8 : i32
    %c0 = arith.constant 0 : index
    %c0_8 = arith.constant 0 : index
    %11 = vector.load %arg3[%c0, %c0_8] : memref<8x256xf32, #tpu.memory_space<vmem>>, vector<8x256xf32>
    %12 = arith.index_cast %2 : i32 to index
    %c0_9 = arith.constant 0 : index
    %c0_10 = arith.constant 0 : index
    %13 = vector.load %arg6[%12, %c0_9, %c0_10] : memref<2x8x256xf32, #tpu.memory_space<vmem>>, vector<1x8x256xf32>
    %14 = vector.shape_cast %13 : vector<1x8x256xf32> to vector<8x256xf32>
    %15 = arith.subf %11, %14 : vector<8x256xf32>
    %16 = arith.mulf %15, %15 : vector<8x256xf32>
    %cst = arith.constant dense<0.000000e+00> : vector<8xf32>
    %17 = vector.multi_reduction <add>, %16, %cst [1] : vector<8x256xf32> to vector<8xf32>
    %18 = vector.shape_cast %17 : vector<8xf32> to vector<8x1xf32>
    %cst_11 = arith.constant 9.99999996E-13 : f32
    %cst_12 = arith.constant 9.99999995E+11 : f32
    %19 = vector.broadcast %cst_11 : f32 to vector<8x1xf32>
    %20 = arith.maximumf %19, %18 : vector<8x1xf32>
    %21 = vector.broadcast %cst_12 : f32 to vector<8x1xf32>
    %22 = arith.minimumf %21, %20 : vector<8x1xf32>
    %23 = tpu.iota {dimensions = array<i32: 0>} : vector<8x1xi32>
    %c8_i32_13 = arith.constant 8 : i32
    %24 = arith.muli %1, %c8_i32_13 : i32
    %25 = vector.broadcast %24 : i32 to vector<8x1xi32>
    %26 = arith.addi %23, %25 : vector<8x1xi32>
    %c8_i32_14 = arith.constant 8 : i32
    %27 = vector.broadcast %c8_i32_14 : i32 to vector<8x1xi32>
    %28 = arith.cmpi slt, %26, %27 : vector<8x1xi32>
    %cst_15 = arith.constant 0.000000e+00 : f32
    %29 = vector.broadcast %cst_15 : f32 to vector<8x1xf32>
    %30 = arith.select %28, %22, %29 : vector<8x1xi1>, vector<8x1xf32>
    %c0_16 = arith.constant 0 : index
    %c0_17 = arith.constant 0 : index
    %31 = vector.load %arg8[%c0_16, %c0_17] : memref<8x1xf32, #tpu.memory_space<vmem>>, vector<8x1xf32>
    %32 = arith.addf %31, %30 : vector<8x1xf32>
    %c0_18 = arith.constant 0 : index
    %c0_19 = arith.constant 0 : index
    %33 = vector.load %arg8[%c0_18, %c0_19] : memref<8x1xf32, #tpu.memory_space<vmem>>, vector<8x1xf32>
    tpu.vector_store %arg8[%c0_18, %c0_19], %32 {strides = array<i32>} : memref<8x1xf32, #tpu.memory_space<vmem>>, vector<8x1xf32>,
    %c0_i32_20 = arith.constant 0 : i32
    %34 = arith.cmpi eq, %arg1, %c0_i32_20 : i32
    %35 = arith.extui %34 : i1 to i32
    %c0_i32_21 = arith.constant 0 : i32
    %36 = arith.cmpi ne, %35, %c0_i32_21 : i32
    scf.if %36 {
      %c0_22 = arith.constant 0 : index
      %c0_23 = arith.constant 0 : index
      %37 = vector.load %arg8[%c0_22, %c0_23] : memref<8x1xf32, #tpu.memory_space<vmem>>, vector<8x1xf32>
      %38 = vector.shape_cast %37 : vector<8x1xf32> to vector<1x8x1xf32>
      %cst_24 = arith.constant dense<0.000000e+00> : vector<1xf32>
      %39 = vector.multi_reduction <add>, %38, %cst_24 [1, 2] : vector<1x8x1xf32> to vector<1xf32>
      %40 = vector.shape_cast %39 : vector<1xf32> to vector<1x1x1xf32>
      %41 = vector.extract %40[0, 0, 0] : f32 from vector<1x1x1xf32>
      %cst_25 = arith.constant 8.000000e+00 : f32
      %42 = arith.divf %41, %cst_25 : f32
      %43 = vector.broadcast %42 : f32 to vector<1x8x128xf32>
      %c0_26 = arith.constant 0 : index
      %c0_27 = arith.constant 0 : index
      %c0_28 = arith.constant 0 : index
      %44 = vector.load %arg5[%c0_26, %c0_27, %c0_28] : memref<1x8x128xf32, #tpu.memory_space<vmem>>, vector<1x8x128xf32>
      tpu.vector_store %arg5[%c0_26, %c0_27, %c0_28], %43 {strides = array<i32>} : memref<1x8x128xf32, #tpu.memory_space<vmem>>, vector<1x8x128xf32>,
    } else {
    }
    return
  }
  func.func @transform_0(%arg0: i32, %arg1: i32, %arg2: memref<8xi32, #tpu.memory_space<smem>>) -> (i32, i32) {
    %c1_i32 = arith.constant 1 : i32
    %0 = arith.muli %arg0, %c1_i32 : i32
    %1 = arith.addi %0, %arg1 : i32
    %c0_i32 = arith.constant 0 : i32
    %c0_i32_0 = arith.constant 0 : i32
    return %1, %c0_i32 : i32, i32
  }
  func.func @transform_2(%arg0: i32, %arg1: i32, %arg2: memref<8xi32, #tpu.memory_space<smem>>) -> (i32, i32, i32) {
    %c0_i32 = arith.constant 0 : i32
    %c0_i32_0 = arith.constant 0 : i32
    %c0_i32_1 = arith.constant 0 : i32
    return %arg0, %c0_i32, %c0_i32_0 : i32, i32, i32
  }
}

</mosaic_0001>

<llo_original>
// kernel: tpu_custom_call.1
$region0: #{tpu_custom_call.1}
  #allocation0 [shape = 'u32[]', space=smem, size = 0x4, offset = 0x4, fixed_abs, tag = 'smem constant byte address 0x4 - core index']
  #allocation1 [shape = 'u32[144,128]{1,0:T(1,128)}', space=vmem, size = 0x12000, scoped, tag = 'internal scratch']
  #allocation2 [shape = 'f32[2,8,256]{2,1,0:T(8,128)}', space=vmem, size = 0x4000, scoped, tag = 'scratch operand']
  #allocation3 [shape = 's32[16]{0}', space=sflag, size = 0x40, scoped, tag = 'scratch operand']
  #allocation4 [shape = 'f32[8,1]{1,0:T(8,128)}', space=vmem, size = 0x1000, scoped, tag = 'scratch operand']
  #allocation5 [shape = 's32[1]{0}', space=sflag, size = 0x4, scoped, tag = 'scoped memory for tpu_custom_call.1']
  #allocation6 [shape = 'u8[512]{0}', space=smem, size = 0x200, scoped, tag = 'prefetched SMEM operand 0']
  #allocation11 [shape = 's32[]', space=sflag, size = 0x4, offset = 0, fixed_abs, tag = 'sflag constant byte address 0x0 - dummy sync flag']
  #allocation12 [shape = 's32[]', space=sflag, size = 0x4, offset = 0, fixed_abs, tag = 'sflag constant byte address 0x0 - dummy sync flag']
  %s0 = inlined_call_operand.hbm [shape: s32[8], index: 0, kind: input, shape index: {}]
  %s1 = inlined_call_operand.hbm [shape: f32[8,256], index: 1, kind: input, shape index: {}]
  %s2 = inlined_call_operand.hbm [shape: f32[751,256], index: 2, kind: input, shape index: {}]
  %s3 = inlined_call_operand.hbm [shape: f32[1,8,128], index: 3, kind: output, shape index: {}]
  %s4 = sld [smem:[#allocation0]]
  $region51: #{tpu_custom_call.1} parent=0
    _
  %s6 = ssub.s32 1, %s4
  %s7 = scalar_select 0, %s6, %s4
  %9 = dma.hbm_to_smem %s0, 16, [#allocation6], [#allocation5]
  %10 = dma.done [#allocation5], 16
  %11 = sfence
  $region1: #{tpu_custom_call.1} parent=0
    #allocation7 [shape = 'u8[8192]{0}', space=vmem, size = 0x2000, scoped, tag = 'input window, operand 1, single buffered']
    #allocation8 [shape = 's32[1]{0}', space=sflag, size = 0x4, scoped, tag = 'scoped memory for tpu_custom_call.1']
    #allocation9 [shape = 's32[1]{0}', space=sflag, size = 0x4, scoped, tag = 'scoped memory for tpu_custom_call.1']
    #allocation10 [shape = 'u8[4096]{0}', space=vmem, size = 0x1000, scoped, tag = 'output window, operand 0, single buffered']
    %12 = vsyncpa [#allocation8], 0
    %13 = vsyncpa [#allocation9], 0
    // Predicated region
    $region2: #{tpu_custom_call.1} parent=1 // pred_check
      _
    $region3: #{tpu_custom_call.1} parent=1 // pred_check_branch
      %15 = sbr.rel (0) target = $region5
    $region4: #{tpu_custom_call.1} parent=1 // pred_region
      %s16 = sadd.s32 0, 0
      %s18 = ssub.s32 256, 256
      %19 = vsyncadd [#allocation8], %s18
      %s20 = smul.addr %s16, 2
      %s21 = smul.addr %s20, 128
      %s22 = scalar_lea.hbm %s1, %s21
      %s24 = sshll.u32 [#allocation7], 4
      %s25 = int_to_ptr.vmem [resolvable:$true] %s24
      %27 = dma.hbm_to_vmem [thread:$0]  %s22, 256, %s25, [#allocation8]
    $region5: #{tpu_custom_call.1} parent=1 // pred_fallthru
      _
    // Predicated region
    $region6: #{tpu_custom_call.1} parent=1 // pred_check
      _
    $region7: #{tpu_custom_call.1} parent=1 // pred_check_branch
      %29 = sbr.rel (0) target = $region9
    $region8: #{tpu_custom_call.1} parent=1 // pred_region
      %30 = dma.done [#allocation8], 256
    $region9: #{tpu_custom_call.1} parent=1 // pred_fallthru
      _
    %s31 = sadd.s32 0, 0
    %s32 = sadd.s32 0, 0
    %s33 = sand.u32 0, 1
    %p34 = scmp.eq.s32.totalorder 0, 0
    // Predicated region
    $region10: #{tpu_custom_call.1} parent=1 // pred_check
      %p35 = pneg %p34
    $region11: #{tpu_custom_call.1} parent=1 // pred_check_branch
      %37 = sbr.rel (%p35) target = $region13
    $region12: #{tpu_custom_call.1} parent=1 // pred_region
      %vm38 = vcmask 7168
      %39 = vst.msk [vmem:[#allocation4] sm:$0xff] %vm38, 0.0
      %s40 = smul.u32 %s32, 8
      loop: start=0, step=1, limit=8
      $region14: #{tpu_custom_call.1} parent=12 // loop_pre_header
        _
      $region15: #{tpu_custom_call.1} parent=12 // loop_header
        %s42 = sphi 0, %s46
        %p43 = scmp.ge.s32.totalorder %s42, 8
      $region16: #{tpu_custom_call.1} parent=12 // loop_header_branch
        %45 = sbr.rel (%p43) target = $region20
      $region17: #{tpu_custom_call.1} parent=12 // loop_body
        %s47 = sadd.s32 %s40, %s42
        %s48 = sld [smem:[#allocation6 + %s47]]
        %s49 = sshrl.u32 %s48, 3
        %s50 = sand.u32 %s48, 7
        %s51 = smul.u32 %s49, 16
        %s52 = sadd.s32 %s50, %s51
        %s53 = smul.addr %s52, 16
        %s54 = scalar_lea.hbm %s2, %s53
        %s55 = sshrl.u32 %s42, 3
        %s56 = sand.u32 %s42, 7
        %s57 = smul.u32 %s55, 16
        %s58 = sadd.s32 %s56, %s57
        %s59 = scalar_lea.vmem [#allocation2], %s58
        %s60 = scalar_lea.sflag [#allocation3], %s42
        %s62 = sshll.u32 %s59, 4
        %s63 = int_to_ptr.vmem [resolvable:$true] %s62
        %65 = dma.hbm_to_vmem [thread:$0]  %s54, 32, %s63, %s60, 128, 128, 1
      $region18: #{tpu_custom_call.1} parent=12 // loop_footer
        %s46 = sadd.s32 1, %s42
      $region19: #{tpu_custom_call.1} parent=12 // loop_footer_branch
        %41 = sbr.rel target = $region15
      $region20: #{tpu_custom_call.1} parent=12 // loop_exit
        _
    $region13: #{tpu_custom_call.1} parent=1 // pred_fallthru
      _
    %s66 = sadd.s32 0, 1
    %p67 = scmp.lt.s32.totalorder %s66, 1
    // Predicated region
    $region21: #{tpu_custom_call.1} parent=1 // pred_check
      %p68 = pneg %p67
    $region22: #{tpu_custom_call.1} parent=1 // pred_check_branch
      %70 = sbr.rel (%p68) target = $region24
    $region23: #{tpu_custom_call.1} parent=1 // pred_region
      %s71 = sadd.s32 %s32, 1
      %s72 = ssub.s32 1, %s33
      %s73 = smul.u32 %s71, 8
      loop: start=0, step=1, limit=8
      $region25: #{tpu_custom_call.1} parent=23 // loop_pre_header
        _
      $region26: #{tpu_custom_call.1} parent=23 // loop_header
        %s75 = sphi 0, %s79
        %p76 = scmp.ge.s32.totalorder %s75, 8
      $region27: #{tpu_custom_call.1} parent=23 // loop_header_branch
        %78 = sbr.rel (%p76) target = $region31
      $region28: #{tpu_custom_call.1} parent=23 // loop_body
        %s80 = sadd.s32 %s73, %s75
        %s81 = sld [smem:[#allocation6 + %s80]]
        %s82 = sshrl.u32 %s81, 3
        %s83 = sand.u32 %s81, 7
        %s84 = smul.u32 %s82, 16
        %s85 = sadd.s32 %s83, %s84
        %s86 = smul.addr %s85, 16
        %s87 = scalar_lea.hbm %s2, %s86
        %s88 = sshrl.u32 %s75, 3
        %s89 = sand.u32 %s75, 7
        %s90 = smul.u32 %s88, 16
        %s91 = sadd.s32 %s89, %s90
        %s92 = smul.u32 %s72, 16
        %s93 = sadd.s32 %s91, %s92
        %s94 = scalar_lea.vmem [#allocation2], %s93
        %s95 = smul.u32 %s72, 8
        %s96 = sadd.s32 %s75, %s95
        %s97 = scalar_lea.sflag [#allocation3], %s96
        %s99 = sshll.u32 %s94, 4
        %s100 = int_to_ptr.vmem [resolvable:$true] %s99
        %102 = dma.hbm_to_vmem [thread:$0]  %s87, 32, %s100, %s97, 128, 128, 1
      $region29: #{tpu_custom_call.1} parent=23 // loop_footer
        %s79 = sadd.s32 1, %s75
      $region30: #{tpu_custom_call.1} parent=23 // loop_footer_branch
        %74 = sbr.rel target = $region26
      $region31: #{tpu_custom_call.1} parent=23 // loop_exit
        _
    $region24: #{tpu_custom_call.1} parent=1 // pred_fallthru
      _
    loop: start=0, step=1, limit=8
    $region32: #{tpu_custom_call.1} parent=1 // loop_pre_header
      _
    $region33: #{tpu_custom_call.1} parent=1 // loop_header
      %s104 = sphi 0, %s108
      %p105 = scmp.ge.s32.totalorder %s104, 8
    $region34: #{tpu_custom_call.1} parent=1 // loop_header_branch
      %107 = sbr.rel (%p105) target = $region38
    $region35: #{tpu_custom_call.1} parent=1 // loop_body
      %s109 = smul.u32 %s33, 8
      %s110 = sadd.s32 %s104, %s109
      %s111 = scalar_lea.sflag [#allocation3], %s110
      %113 = dma.done %s111, 32
    $region36: #{tpu_custom_call.1} parent=1 // loop_footer
      %s108 = sadd.s32 1, %s104
    $region37: #{tpu_custom_call.1} parent=1 // loop_footer_branch
      %103 = sbr.rel target = $region33
    $region38: #{tpu_custom_call.1} parent=1 // loop_exit
      _
    %v114 = vld [vmem:[#allocation7] sm:$0xff]
    %v115 = vld [vmem:[#allocation7 + $0x8] sm:$0xff]
    %s116 = smul.u32 %s33, 2
    %s117 = smul.addr %s116, 8
    %s118 = scalar_lea.vmem [#allocation2], %s117
    %v119 = vld [vmem:[%s118] sm:$0xff]
    %v120 = vld [vmem:[%s118 + $0x8] sm:$0xff]
    %v121 = vsub.f32 %v114, %v119
    %v122 = vsub.f32 %v115, %v120
    %v123 = vmul.f32 %v121, %v121
    %v124 = vmul.f32 %v122, %v122
    %v125 = vadd.f32 %v123, %v124
    %126 = vadd.xlane.f32.xlu0 %v125
    %v127 = vpop.xlane.xlu0 %126
    %v128 = vmax.f32 %v127, 1e-12
    %v129 = vmin.f32 %v128, 1e+12
    %v130 = vlaneseq
    %v131 = vshrl.u32 %v130, 7
    %s132 = smul.u32 %s32, 8
    %v133 = vstv %s132
    %v134 = vadd.s32 %v131, %v133
    %vm135 = vcmp.lt.s32.totalorder %v134, 8
    %v136 = vsel %vm135, %v129, 0.0
    %v137 = vld [vmem:[#allocation4] sm:$0xff]
    %v138 = vadd.f32 %v137, %v136
    %vm139 = vcmask 7168
    %140 = vst.msk [vmem:[#allocation4] sm:$0xff] %vm139, %v138
    // Predicated region
    $region39: #{tpu_custom_call.1} parent=1 // pred_check
      %p141 = pneg %p34
    $region40: #{tpu_custom_call.1} parent=1 // pred_check_branch
      %143 = sbr.rel (%p141) target = $region42
    $region41: #{tpu_custom_call.1} parent=1 // pred_region
      %v144 = vld [vmem:[#allocation4] sm:$0xff]
      %v145 = vsel %vm139, %v144, 0.0
      %146 = vadd.xlane.f32.xlu0 %v145
      %v147 = vpop.xlane.xlu0 %146
      %v148 = vrot.slane %v147, 4
      %v149 = vadd.f32 %v147, %v148
      %v150 = vrot.slane %v149, 2
      %v151 = vadd.f32 %v149, %v150
      %v152 = vrot.slane %v151, 1
      %v153 = vadd.f32 %v151, %v152
      %s154 = vtos %v153
      %v155 = vrcp.pop 8.0
      %s156 = vtos %v155
      %s157 = smul.f32 %s154, %s156
      %v158 = vstv %s157
      %159 = vst [vmem:[#allocation10] sm:$0xff] %v158
    $region42: #{tpu_custom_call.1} parent=1 // pred_fallthru
      _
    // Predicated region
    $region43: #{tpu_custom_call.1} parent=1 // pred_check
      _
    $region44: #{tpu_custom_call.1} parent=1 // pred_check_branch
      %161 = sbr.rel (0) target = $region46
    $region45: #{tpu_custom_call.1} parent=1 // pred_region
      %s163 = ssub.s32 128, 128
      %164 = vsyncadd [#allocation9], %s163
      %s166 = sshll.u32 [#allocation10], 4
      %s167 = int_to_ptr.vmem [resolvable:$true] %s166
      %169 = dma.vmem_to_hbm [thread:$0]  %s167, 128, %s3, [#allocation9]
    $region46: #{tpu_custom_call.1} parent=1 // pred_fallthru
      _
    // Predicated region
    $region47: #{tpu_custom_call.1} parent=1 // pred_check
      _
    $region48: #{tpu_custom_call.1} parent=1 // pred_check_branch
      %171 = sbr.rel (0) target = $region50
    $region49: #{tpu_custom_call.1} parent=1 // pred_region
      %172 = dma.done [#allocation9], 128
    $region50: #{tpu_custom_call.1} parent=1 // pred_fallthru
      _
    %173 = vsyncpa [#allocation8], 1
    %174 = vsyncpa [#allocation9], 1
  %175 = vsyncmov [#allocation3]
  %s176 = vpop.sfrf %175
  %p177 = scmp.eq.s32.totalorder %s176, 0
  %p178 = pneg %p177
  %180 = shalt.err (%p178)
  %s181 = scalar_lea.sflag [#allocation3], 1
  %182 = vsyncmov %s181
  %s183 = vpop.sfrf %182
  %p184 = scmp.eq.s32.totalorder %s183, 0
  %p185 = pneg %p184
  %187 = shalt.err (%p185)
  %s188 = scalar_lea.sflag [#allocation3], 2
  %189 = vsyncmov %s188
  %s190 = vpop.sfrf %189
  %p191 = scmp.eq.s32.totalorder %s190, 0
  %p192 = pneg %p191
  %194 = shalt.err (%p192)
  %s195 = scalar_lea.sflag [#allocation3], 3
  %196 = vsyncmov %s195
  %s197 = vpop.sfrf %196
  %p198 = scmp.eq.s32.totalorder %s197, 0
  %p199 = pneg %p198
  %201 = shalt.err (%p199)
  %s202 = scalar_lea.sflag [#allocation3], 4
  %203 = vsyncmov %s202
  %s204 = vpop.sfrf %203
  %p205 = scmp.eq.s32.totalorder %s204, 0
  %p206 = pneg %p205
  %208 = shalt.err (%p206)
  %s209 = scalar_lea.sflag [#allocation3], 5
  %210 = vsyncmov %s209
  %s211 = vpop.sfrf %210
  %p212 = scmp.eq.s32.totalorder %s211, 0
  %p213 = pneg %p212
  %215 = shalt.err (%p213)
  %s216 = scalar_lea.sflag [#allocation3], 6
  %217 = vsyncmov %s216
  %s218 = vpop.sfrf %217
  %p219 = scmp.eq.s32.totalorder %s218, 0
  %p220 = pneg %p219
  %222 = shalt.err (%p220)
  %s223 = scalar_lea.sflag [#allocation3], 7
  %224 = vsyncmov %s223
  %s225 = vpop.sfrf %224
  %p226 = scmp.eq.s32.totalorder %s225, 0
  %p227 = pneg %p226
  %229 = shalt.err (%p227)
  %s230 = scalar_lea.sflag [#allocation3], 8
  %231 = vsyncmov %s230
  %s232 = vpop.sfrf %231
  %p233 = scmp.eq.s32.totalorder %s232, 0
  %p234 = pneg %p233
  %236 = shalt.err (%p234)
  %s237 = scalar_lea.sflag [#allocation3], 9
  %238 = vsyncmov %s237
  %s239 = vpop.sfrf %238
  %p240 = scmp.eq.s32.totalorder %s239, 0
  %p241 = pneg %p240
  %243 = shalt.err (%p241)
  %s244 = scalar_lea.sflag [#allocation3], 10
  %245 = vsyncmov %s244
  %s246 = vpop.sfrf %245
  %p247 = scmp.eq.s32.totalorder %s246, 0
  %p248 = pneg %p247
  %250 = shalt.err (%p248)
  %s251 = scalar_lea.sflag [#allocation3], 11
  %252 = vsyncmov %s251
  %s253 = vpop.sfrf %252
  %p254 = scmp.eq.s32.totalorder %s253, 0
  %p255 = pneg %p254
  %257 = shalt.err (%p255)
  %s258 = scalar_lea.sflag [#allocation3], 12
  %259 = vsyncmov %s258
  %s260 = vpop.sfrf %259
  %p261 = scmp.eq.s32.totalorder %s260, 0
  %p262 = pneg %p261
  %264 = shalt.err (%p262)
  %s265 = scalar_lea.sflag [#allocation3], 13
  %266 = vsyncmov %s265
  %s267 = vpop.sfrf %266
  %p268 = scmp.eq.s32.totalorder %s267, 0
  %p269 = pneg %p268
  %271 = shalt.err (%p269)
  %s272 = scalar_lea.sflag [#allocation3], 14
  %273 = vsyncmov %s272
  %s274 = vpop.sfrf %273
  %p275 = scmp.eq.s32.totalorder %s274, 0
  %p276 = pneg %p275
  %278 = shalt.err (%p276)
  %s279 = scalar_lea.sflag [#allocation3], 15
  %280 = vsyncmov %s279
  %s281 = vpop.sfrf %280
  %p282 = scmp.eq.s32.totalorder %s281, 0
  %p283 = pneg %p282
  %285 = shalt.err (%p283)

</llo_original>
